<compile_context>
chip_gen: v6e
topology: v6e:2x2x1
jax: 0.10.0
libtpu: 0.0.40
codegen_flags: <defaults>
</compile_context>

<pallas_src>
import functools

import jax
import jax.numpy as jnp
from jax import lax
from jax.experimental import pallas as pl
from jax.experimental.pallas import tpu as pltpu


# Taps grouped by (row parity, col parity) so consecutive reduction steps keep
# the same phase-image block index and Pallas skips the re-fetch.
_TAP_ORDER = ((0, 0), (0, 2), (2, 0), (2, 2),   # phase (0,0)
              (0, 1), (2, 1),                   # phase (0,1)
              (1, 0), (1, 2),                   # phase (1,0)
              (1, 1))                           # phase (1,1)


def _vmem_budget_bytes():
    """Usable VMEM budget = device capacity minus headroom (v7x-safe)."""
    cap = 64 * 2**20
    try:
        info = pltpu.get_tpu_info()
        cap = int(getattr(info, "vmem_capacity_bytes", cap))
    except Exception:
        pass
    return max(24 * 2**20, cap - 16 * 2**20)


# ---------------------------------------------------------------------------
# Conv path: 9-tap accumulated matmul over 2x2 phase-decomposed, row-tiled NHWC.
# ---------------------------------------------------------------------------
def _pick_conv_tiles(Ho, Wo, Cin, Cout_pad, out_isz):
    """Pick (TM row tile, TN cout tile) so double-buffered blocks + acc fit."""
    budget = _vmem_budget_bytes()
    tn_opts = [t for t in (512, 384, 256, 128)
               if t <= Cout_pad and Cout_pad % t == 0] or [128]
    tm_hi = min(512, ((Ho + 7) // 8) * 8)
    for TN in tn_opts:
        TM = tm_hi
        while TM >= 8:
            need = (2 * (TM + 1) * (Wo + 1) * Cin * 2      # x block (bf16) x2
                    + 2 * 9 * Cin * TN * 2                 # hoisted weights x2
                    + 2 * 8 * TN * 4                       # bias x2 (padded)
                    + 2 * TM * Wo * TN * out_isz           # out block x2
                    + TM * Wo * TN * 4                     # f32 accumulator
                    + (2 << 20))                           # slack
            if need <= budget:
                return TM, TN, budget
            TM -= 8
    return 8, tn_opts[-1], budget


def _conv_tap_kernel(tm, wo, pt_ref, dh_ref, dw_ref,
                     x_ref, w_ref, b_ref, o_ref, acc_ref):
    """One (image n, cout tile j, row tile m, tap t) step: acc += X_tap @ W_tap."""
    del pt_ref  # only used by the index_map
    t = pl.program_id(3)

    @pl.when(t == 0)
    def _init():
        acc_ref[...] = jnp.zeros_like(acc_ref)

    cin = x_ref.shape[-1]
    dh = dh_ref[t]                    # row offset (0/1) inside the phase tile
    dw = dw_ref[t]                    # col offset (0/1) inside the phase tile

    xrows = x_ref[pl.ds(dh, tm)]      # (tm, wo+1, cin): dynamic major-dim start
    wt = w_ref[t]                     # (cin, TN): hoisted weight slab for tap t

    # Only one of the two branches runs at runtime (real branch, not a select),
    # so the tap window is loaded/repacked exactly once per tap.
    @pl.when(dw == 0)
    def _acc_left():
        xt = xrows[:, 0:wo, :].reshape(tm * wo, cin)
        acc_ref[...] += jnp.dot(xt, wt, preferred_element_type=jnp.float32)

    @pl.when(dw == 1)
    def _acc_right():
        xt = xrows[:, 1:wo + 1, :].reshape(tm * wo, cin)
        acc_ref[...] += jnp.dot(xt, wt, preferred_element_type=jnp.float32)

    @pl.when(t == pl.num_programs(3) - 1)
    def _finalize():
        o_ref[...] = (acc_ref[...] + b_ref[...]).astype(o_ref.dtype)


def _downsample_conv_impl(x, w, b, tm_cap=None):
    N, Cin, H, W = x.shape
    Cout = w.shape[0]
    Ho = (H - 2) // 2 + 1
    Wo = (W - 2) // 2 + 1

    Cout_pad = ((Cout + 127) // 128) * 128
    TM, TN, vmem_limit = _pick_conv_tiles(
        Ho, Wo, Cin, Cout_pad, jnp.dtype(x.dtype).itemsize)
    if tm_cap is not None:                     # test hook: force spatial tiling
        TM = max(1, min(TM, int(tm_cap)))
    M = -(-Ho // TM)                           # cdiv
    Ho_pad = M * TM
    J = Cout_pad // TN
    Hp = 2 * (Ho_pad + 1)
    Wp = 2 * (Wo + 1)

    # Zero-pad NCHW once (extra rows/cols beyond the module's (0,1,0,1) pad are
    # only read by discarded padded output rows), then one fused transpose+cast
    # produces the phase stack: xph[n, 2*ph+pw, i, j, c] = xpad[n, c, 2i+ph, 2j+pw].
    xpad = jnp.pad(x, ((0, 0), (0, 0), (0, Hp - H), (0, Wp - W)))
    xph = xpad.reshape(N, Cin, Ho_pad + 1, 2, Wo + 1, 2)
    xph = xph.transpose(0, 3, 5, 2, 4, 1).astype(jnp.bfloat16)
    xph = xph.reshape(N, 4, Ho_pad + 1, Wo + 1, Cin)

    # Row tiles with a 1-row halo, materialized in the wrapper (BlockSpec blocks
    # cannot overlap).  When M == 1 this is a metadata-only reshape.
    if M == 1:
        xtile = xph.reshape(N, 4, 1, TM + 1, Wo + 1, Cin)
    else:
        body = xph[:, :, :M * TM].reshape(N, 4, M, TM, Wo + 1, Cin)
        halo = xph[:, :, TM::TM][:, :, :, None]          # rows TM, 2TM, ..., M*TM
        xtile = jnp.concatenate([body, halo], axis=3)    # (N,4,M,TM+1,Wo+1,Cin)

    # Per-tap weights (9, Cin, Cout_pad) in phase-grouped order; lane-padded Cout.
    wt = jnp.stack([w[:, :, kh, kw].T for kh, kw in _TAP_ORDER], axis=0)
    wt = jnp.pad(wt, ((0, 0), (0, 0), (0, Cout_pad - Cout))).astype(jnp.bfloat16)
    bt = jnp.pad(b.astype(jnp.float32), (0, Cout_pad - Cout)).reshape(1, Cout_pad)

    pt_tbl = jnp.array([(kh % 2) * 2 + (kw % 2) for kh, kw in _TAP_ORDER], jnp.int32)
    dh_tbl = jnp.array([kh // 2 for kh, _ in _TAP_ORDER], jnp.int32)
    dw_tbl = jnp.array([kw // 2 for _, kw in _TAP_ORDER], jnp.int32)

    kernel = functools.partial(_conv_tap_kernel, TM, Wo)
    out = pl.pallas_call(
        kernel,
        out_shape=jax.ShapeDtypeStruct((N, M, TM * Wo, Cout_pad), x.dtype),
        grid_spec=pltpu.PrefetchScalarGridSpec(
            num_scalar_prefetch=3,
            grid=(N, J, M, 9),
            in_specs=[
                # phase-image row tile for (n, phase(t), m): (TM+1, Wo+1, Cin)
                pl.BlockSpec((None, None, None, TM + 1, Wo + 1, Cin),
                             lambda n, j, m, t, pt, dh, dw: (n, pt[t], m, 0, 0, 0)),
                # all 9 per-tap weight slabs, hoisted (constant across m, t)
                pl.BlockSpec((9, Cin, TN),
                             lambda n, j, m, t, pt, dh, dw: (0, 0, j)),
                # bias (1, TN)
                pl.BlockSpec((1, TN),
                             lambda n, j, m, t, pt, dh, dw: (0, j)),
            ],
            out_specs=pl.BlockSpec((None, None, TM * Wo, TN),
                                   lambda n, j, m, t, pt, dh, dw: (n, m, 0, j)),
            scratch_shapes=[pltpu.VMEM((TM * Wo, TN), jnp.float32)],
        ),
        compiler_params=pltpu.CompilerParams(
            dimension_semantics=("parallel", "parallel", "parallel", "arbitrary"),
            vmem_limit_bytes=int(vmem_limit),
        ),
    )(pt_tbl, dh_tbl, dw_tbl, xtile, wt, bt)

    out = out.reshape(N, Ho_pad, Wo, Cout_pad)[:, :Ho, :, :Cout]
    # TODO(synk): keep NHWC / bf16 end-to-end if the caller accepts it; this
    # final transpose back to NCHW is kept for PyTorch parity.
    return jnp.transpose(out, (0, 3, 1, 2))


_downsample_conv = jax.jit(_downsample_conv_impl, static_argnames=("tm_cap",))


# ---------------------------------------------------------------------------
# Avg-pool path (with_conv=False): single fused, pipelined kernel.
# ---------------------------------------------------------------------------
def _avgpool_kernel(x_ref, p_ref, o_ref):
    # x_ref: (TR, 2, We)   p_ref: (We, Wo)   o_ref: (TR, Wo)
    rs = x_ref[:, 0, :] + x_ref[:, 1, :]                    # row-pair sum
    cs = jnp.dot(rs, p_ref[...], preferred_element_type=jnp.float32)
    o_ref[...] = (cs * 0.25).astype(o_ref.dtype)


def _avg_pool_impl(x):
    N, C, H, W = x.shape
    Ho, Wo = H // 2, W // 2
    We = 2 * Wo
    Ro = N * C * Ho
    isz = jnp.dtype(x.dtype).itemsize

    # Metadata-only reshape for even H/W (slice copy only for odd trailing dims).
    xr = x[:, :, :2 * Ho, :We].reshape(Ro, 2, We)
    # Exact 0/1 column-pair pooling matrix: P[2j, j] = P[2j+1, j] = 1.
    pool_mat = jnp.repeat(jnp.eye(Wo, dtype=x.dtype), 2, axis=0)   # (We, Wo)

    # Large row tile: double-buffered in + out blocks under ~12 MiB.
    per_row = 2 * (2 * We + Wo) * isz
    TR = (12 * 2**20) // max(per_row, 1)
    TR = max(8, (TR // 8) * 8)
    TR = max(1, min(TR, Ro, 4096))

    out = pl.pallas_call(
        _avgpool_kernel,
        out_shape=jax.ShapeDtypeStruct((Ro, Wo), x.dtype),
        grid=(pl.cdiv(Ro, TR),),
        in_specs=[pl.BlockSpec((TR, 2, We), lambda i: (i, 0, 0)),
                  pl.BlockSpec((We, Wo), lambda i: (0, 0))],
        out_specs=pl.BlockSpec((TR, Wo), lambda i: (i, 0)),
        compiler_params=pltpu.CompilerParams(
            dimension_semantics=("parallel",),
            vmem_limit_bytes=int(min(_vmem_budget_bytes(), 32 * 2**20)),
        ),
    )(xr, pool_mat)
    return out.reshape(N, C, Ho, Wo)


_avg_pool = jax.jit(_avg_pool_impl)


# ---------------------------------------------------------------------------
# Public wrapper (forward pass of DownSample)
# ---------------------------------------------------------------------------
def downsample(x, w=None, b=None, *, with_conv=True):
    """x: (N, C, H, W); w: (C, C, 3, 3); b: (C,).  Returns NCHW output."""
    if with_conv:
        return _downsample_conv(x, w, b)
    return _avg_pool(x)


# ---------------------------------------------------------------------------
# Deterministic example / self-check
# ---------------------------------------------------------------------------
if __name__ == "__main__":
    key = jax.random.PRNGKey(0)
    kx, kw, kb = jax.random.split(key, 3)

    N, C, H, W = 2, 4, 16, 16
    x = jax.random.normal(kx, (N, C, H, W), dtype=jnp.float32)
    w = 0.1 * jax.random.normal(kw, (C, C, 3, 3), dtype=jnp.float32)
    b = 0.01 * jax.random.normal(kb, (C,), dtype=jnp.float32)

    # ---- with_conv=True path ----
    y_conv = jax.block_until_ready(downsample(x, w, b, with_conv=True))
    # Also exercise the spatially-tiled (M > 1, halo) code path explicitly.
    y_conv_tiled = jax.block_until_ready(_downsample_conv(x, w, b, tm_cap=4))

    # Reference on the same bf16-rounded inputs (kernel uses bf16 MXU operands
    # with f32 accumulation), full-precision conv.
    xref = x.astype(jnp.bfloat16).astype(jnp.float32)
    wref = w.astype(jnp.bfloat16).astype(jnp.float32)
    ref_conv = lax.conv_general_dilated(
        xref, wref, window_strides=(2, 2), padding=((0, 1), (0, 1)),
        dimension_numbers=("NCHW", "OIHW", "NCHW"),
        precision=lax.Precision.HIGHEST) + b[None, :, None, None]
    assert y_conv.shape == (N, C, H // 2, W // 2), y_conv.shape
    assert jnp.allclose(y_conv, ref_conv, atol=2e-3, rtol=2e-3), (
        float(jnp.max(jnp.abs(y_conv - ref_conv))))
    assert jnp.allclose(y_conv_tiled, ref_conv, atol=2e-3, rtol=2e-3), (
        float(jnp.max(jnp.abs(y_conv_tiled - ref_conv))))

    # ---- with_conv=False path (avg_pool2d k=2, s=2) ----
    y_pool = jax.block_until_ready(downsample(x, with_conv=False))
    ref_pool = x.reshape(N, C, H // 2, 2, W // 2, 2).mean(axis=(3, 5))
    assert y_pool.shape == (N, C, H // 2, W // 2), y_pool.shape
    assert jnp.allclose(y_pool, ref_pool, atol=1e-5, rtol=1e-5)

    print("KERNEL_OK")
</pallas_src>

<mosaic_0001>
module attributes {stable_mosaic.version = 11 : i64} {
  func.func @_conv_tap_kernel(%arg0: i32, %arg1: i32, %arg2: i32, %arg3: i32, %arg4: memref<9xi32, #tpu.memory_space<smem>>, %arg5: memref<9xi32, #tpu.memory_space<smem>>, %arg6: memref<9xi32, #tpu.memory_space<smem>>, %arg7: memref<1x1x1x9x9x4xbf16, #tpu.memory_space<vmem>>, %arg8: memref<9x4x128xbf16, #tpu.memory_space<vmem>>, %arg9: memref<1x128xf32, #tpu.memory_space<vmem>>, %arg10: memref<1x1x64x128xf32, #tpu.memory_space<vmem>>, %arg11: memref<64x128xf32, #tpu.memory_space<vmem>>) attributes {dimension_semantics = [#tpu.dimension_semantics<parallel>, #tpu.dimension_semantics<parallel>, #tpu.dimension_semantics<parallel>, #tpu.dimension_semantics<arbitrary>], iteration_bounds = array<i64: 2, 1, 1, 9>, scalar_prefetch = 3 : i64, scratch_operands = 1 : i64, tpu.core_type = #tpu.core_type<tc>, window_params = [{transform_indices = @transform_0, window_bounds = array<i64: 1, 1, 1, 9, 9, 4>}, {transform_indices = @transform_1, window_bounds = array<i64: 9, 4, 128>}, {transform_indices = @transform_2, window_bounds = array<i64: 1, 128>}, {transform_indices = @transform_3, window_bounds = array<i64: 1, 1, 64, 128>}]} {
    %c0_i32 = arith.constant 0 : i32
    %0 = arith.cmpi eq, %arg3, %c0_i32 : i32
    %1 = arith.extui %0 : i1 to i32
    %c0_i32_0 = arith.constant 0 : i32
    %2 = arith.cmpi ne, %1, %c0_i32_0 : i32
    scf.if %2 {
      %cst = arith.constant 0.000000e+00 : f32
      %22 = vector.broadcast %cst : f32 to vector<64x128xf32>
      %c0_11 = arith.constant 0 : index
      %c0_12 = arith.constant 0 : index
      %23 = vector.load %arg11[%c0_11, %c0_12] : memref<64x128xf32, #tpu.memory_space<vmem>>, vector<64x128xf32>
      tpu.vector_store %arg11[%c0_11, %c0_12], %22 {strides = array<i32>} : memref<64x128xf32, #tpu.memory_space<vmem>>, vector<64x128xf32>,
    } else {
    }
    %3 = arith.index_cast %arg3 : i32 to index
    %4 = memref.load %arg5[%3] : memref<9xi32, #tpu.memory_space<smem>>
    %5 = arith.index_cast %arg3 : i32 to index
    %6 = memref.load %arg6[%5] : memref<9xi32, #tpu.memory_space<smem>>
    %c0 = arith.constant 0 : index
    %c0_1 = arith.constant 0 : index
    %c0_2 = arith.constant 0 : index
    %7 = arith.index_cast %4 : i32 to index
    %c0_3 = arith.constant 0 : index
    %c0_4 = arith.constant 0 : index
    %8 = vector.load %arg7[%c0, %c0_1, %c0_2, %7, %c0_3, %c0_4] : memref<1x1x1x9x9x4xbf16, #tpu.memory_space<vmem>>, vector<1x1x1x8x9x4xbf16>
    %9 = vector.shape_cast %8 : vector<1x1x1x8x9x4xbf16> to vector<8x9x4xbf16>
    %10 = arith.index_cast %arg3 : i32 to index
    %c0_5 = arith.constant 0 : index
    %c0_6 = arith.constant 0 : index
    %11 = vector.load %arg8[%10, %c0_5, %c0_6] : memref<9x4x128xbf16, #tpu.memory_space<vmem>>, vector<1x4x128xbf16>
    %12 = vector.shape_cast %11 : vector<1x4x128xbf16> to vector<4x128xbf16>
    %c0_i32_7 = arith.constant 0 : i32
    %13 = arith.cmpi eq, %6, %c0_i32_7 : i32
    %14 = arith.extui %13 : i1 to i32
    %c0_i32_8 = arith.constant 0 : i32
    %15 = arith.cmpi ne, %14, %c0_i32_8 : i32
    scf.if %15 {
      %22 = vector.extract_strided_slice %9 {offsets = [0, 0, 0], sizes = [8, 8, 4], strides = [1, 1, 1]} : vector<8x9x4xbf16> to vector<8x8x4xbf16>
      %23 = vector.shape_cast %22 : vector<8x8x4xbf16> to vector<64x4xbf16>
      %c0_11 = arith.constant 0 : index
      %c0_12 = arith.constant 0 : index
      %24 = vector.load %arg11[%c0_11, %c0_12] : memref<64x128xf32, #tpu.memory_space<vmem>>, vector<64x128xf32>
      %cst = arith.constant dense<0.000000e+00> : vector<64x128xf32>
      %25 = tpu.matmul %23, %12, %cst {dimension_numbers = #tpu.dot_dimension_numbers<[1], [0], [0], [1], [0, 0, 1, 1], [], []>} : vector<64x4xbf16>, vector<4x128xbf16>, vector<64x128xf32> -> vector<64x128xf32>
      %26 = arith.addf %24, %25 : vector<64x128xf32>
      %c0_13 = arith.constant 0 : index
      %c0_14 = arith.constant 0 : index
      %27 = vector.load %arg11[%c0_13, %c0_14] : memref<64x128xf32, #tpu.memory_space<vmem>>, vector<64x128xf32>
      tpu.vector_store %arg11[%c0_13, %c0_14], %26 {strides = array<i32>} : memref<64x128xf32, #tpu.memory_space<vmem>>, vector<64x128xf32>,
    } else {
    }
    %c1_i32 = arith.constant 1 : i32
    %16 = arith.cmpi eq, %6, %c1_i32 : i32
    %17 = arith.extui %16 : i1 to i32
    %c0_i32_9 = arith.constant 0 : i32
    %18 = arith.cmpi ne, %17, %c0_i32_9 : i32
    scf.if %18 {
      %22 = vector.extract_strided_slice %9 {offsets = [0, 1, 0], sizes = [8, 8, 4], strides = [1, 1, 1]} : vector<8x9x4xbf16> to vector<8x8x4xbf16>
      %23 = vector.shape_cast %22 : vector<8x8x4xbf16> to vector<64x4xbf16>
      %c0_11 = arith.constant 0 : index
      %c0_12 = arith.constant 0 : index
      %24 = vector.load %arg11[%c0_11, %c0_12] : memref<64x128xf32, #tpu.memory_space<vmem>>, vector<64x128xf32>
      %cst = arith.constant dense<0.000000e+00> : vector<64x128xf32>
      %25 = tpu.matmul %23, %12, %cst {dimension_numbers = #tpu.dot_dimension_numbers<[1], [0], [0], [1], [0, 0, 1, 1], [], []>} : vector<64x4xbf16>, vector<4x128xbf16>, vector<64x128xf32> -> vector<64x128xf32>
      %26 = arith.addf %24, %25 : vector<64x128xf32>
      %c0_13 = arith.constant 0 : index
      %c0_14 = arith.constant 0 : index
      %27 = vector.load %arg11[%c0_13, %c0_14] : memref<64x128xf32, #tpu.memory_space<vmem>>, vector<64x128xf32>
      tpu.vector_store %arg11[%c0_13, %c0_14], %26 {strides = array<i32>} : memref<64x128xf32, #tpu.memory_space<vmem>>, vector<64x128xf32>,
    } else {
    }
    %c8_i32 = arith.constant 8 : i32
    %19 = arith.cmpi eq, %arg3, %c8_i32 : i32
    %20 = arith.extui %19 : i1 to i32
    %c0_i32_10 = arith.constant 0 : i32
    %21 = arith.cmpi ne, %20, %c0_i32_10 : i32
    scf.if %21 {
      %c0_11 = arith.constant 0 : index
      %c0_12 = arith.constant 0 : index
      %22 = vector.load %arg11[%c0_11, %c0_12] : memref<64x128xf32, #tpu.memory_space<vmem>>, vector<64x128xf32>
      %c0_13 = arith.constant 0 : index
      %c0_14 = arith.constant 0 : index
      %23 = vector.load %arg9[%c0_13, %c0_14] : memref<1x128xf32, #tpu.memory_space<vmem>>, vector<1x128xf32>
      %24 = vector.broadcast %23 : vector<1x128xf32> to vector<64x128xf32>
      %25 = arith.addf %22, %24 : vector<64x128xf32>
      %c0_15 = arith.constant 0 : index
      %c0_16 = arith.constant 0 : index
      %c0_17 = arith.constant 0 : index
      %c0_18 = arith.constant 0 : index
      %26 = vector.load %arg10[%c0_15, %c0_16, %c0_17, %c0_18] : memref<1x1x64x128xf32, #tpu.memory_space<vmem>>, vector<1x1x64x128xf32>
      %27 = vector.shape_cast %26 : vector<1x1x64x128xf32> to vector<64x128xf32>
      %28 = vector.shape_cast %25 : vector<64x128xf32> to vector<1x1x64x128xf32>
      tpu.vector_store %arg10[%c0_15, %c0_16, %c0_17, %c0_18], %28 {strides = array<i32>} : memref<1x1x64x128xf32, #tpu.memory_space<vmem>>, vector<1x1x64x128xf32>,
    } else {
    }
    return
  }
  func.func @transform_0(%arg0: i32, %arg1: i32, %arg2: i32, %arg3: i32, %arg4: memref<9xi32, #tpu.memory_space<smem>>, %arg5: memref<9xi32, #tpu.memory_space<smem>>, %arg6: memref<9xi32, #tpu.memory_space<smem>>) -> (i32, i32, i32, i32, i32, i32) {
    %0 = arith.index_cast %arg3 : i32 to index
    %1 = memref.load %arg4[%0] : memref<9xi32, #tpu.memory_space<smem>>
    %c0_i32 = arith.constant 0 : i32
    %c0_i32_0 = arith.constant 0 : i32
    %c0_i32_1 = arith.constant 0 : i32
    %c0_i32_2 = arith.constant 0 : i32
    return %arg0, %1, %arg2, %c0_i32, %c0_i32_0, %c0_i32_1 : i32, i32, i32, i32, i32, i32
  }
  func.func @transform_1(%arg0: i32, %arg1: i32, %arg2: i32, %arg3: i32, %arg4: memref<9xi32, #tpu.memory_space<smem>>, %arg5: memref<9xi32, #tpu.memory_space<smem>>, %arg6: memref<9xi32, #tpu.memory_space<smem>>) -> (i32, i32, i32) {
    %c0_i32 = arith.constant 0 : i32
    %c0_i32_0 = arith.constant 0 : i32
    %c0_i32_1 = arith.constant 0 : i32
    return %c0_i32, %c0_i32_0, %arg1 : i32, i32, i32
  }
  func.func @transform_2(%arg0: i32, %arg1: i32, %arg2: i32, %arg3: i32, %arg4: memref<9xi32, #tpu.memory_space<smem>>, %arg5: memref<9xi32, #tpu.memory_space<smem>>, %arg6: memref<9xi32, #tpu.memory_space<smem>>) -> (i32, i32) {
    %c0_i32 = arith.constant 0 : i32
    %c0_i32_0 = arith.constant 0 : i32
    return %c0_i32, %arg1 : i32, i32
  }
  func.func @transform_3(%arg0: i32, %arg1: i32, %arg2: i32, %arg3: i32, %arg4: memref<9xi32, #tpu.memory_space<smem>>, %arg5: memref<9xi32, #tpu.memory_space<smem>>, %arg6: memref<9xi32, #tpu.memory_space<smem>>) -> (i32, i32, i32, i32) {
    %c0_i32 = arith.constant 0 : i32
    %c0_i32_0 = arith.constant 0 : i32
    return %arg0, %arg2, %c0_i32, %arg1 : i32, i32, i32, i32
  }
}

</mosaic_0001>

<llo_original>
// kernel: _downsample_conv_impl.1
$region0: #{_downsample_conv_impl.1}
  #allocation0 [shape = 'u32[]', space=smem, size = 0x4, offset = 0x4, fixed_abs, tag = 'smem constant byte address 0x4 - core index']
  #allocation1 [shape = 'u32[144,128]{1,0:T(1,128)}', space=vmem, size = 0x12000, scoped, tag = 'internal scratch']
  #allocation2 [shape = 'f32[64,128]{1,0:T(8,128)}', space=vmem, size = 0x8000, scoped, tag = 'scratch operand']
  #allocation3 [shape = 's32[1]{0}', space=sflag, size = 0x4, scoped, tag = 'scoped memory for _downsample_conv_impl.1']
  #allocation4 [shape = 'u8[512]{0}', space=smem, size = 0x200, scoped, tag = 'prefetched SMEM operand 0']
  #allocation5 [shape = 'u8[512]{0}', space=smem, size = 0x200, scoped, tag = 'prefetched SMEM operand 1']
  #allocation6 [shape = 'u8[512]{0}', space=smem, size = 0x200, scoped, tag = 'prefetched SMEM operand 2']
  %s0 = inlined_call_operand.vmem [shape: s32[9], index: 0, kind: input, shape index: {}]
  %s1 = inlined_call_operand.vmem [shape: s32[9], index: 1, kind: input, shape index: {}]
  %s2 = inlined_call_operand.vmem [shape: s32[9], index: 2, kind: input, shape index: {}]
  %s3 = inlined_call_operand.vmem [shape: bf16[2,4,1,9,9,4], index: 3, kind: input, shape index: {}]
  %s4 = inlined_call_operand.vmem [shape: bf16[9,4,128], index: 4, kind: input, shape index: {}]
  %s5 = inlined_call_operand.vmem [shape: f32[1,128], index: 5, kind: input, shape index: {}]
  %s6 = inlined_call_operand.vmem [shape: f32[2,1,64,128], index: 6, kind: output, shape index: {}]
  %s7 = sld [smem:[#allocation0]]
  $region61: #{_downsample_conv_impl.1} parent=0
    _
  %s9 = ssub.s32 1, %s7
  %s10 = scalar_select 0, %s9, %s7
  %s11 = sshll.u32 %s0, 4
  %s12 = int_to_ptr.vmem [resolvable:$true] %s11
  %14 = dma.vmem_to_smem %s12, 16, [#allocation4], [#allocation3]
  %s15 = sshll.u32 %s1, 4
  %s16 = int_to_ptr.vmem [resolvable:$true] %s15
  %18 = dma.vmem_to_smem %s16, 16, [#allocation5], [#allocation3]
  %s19 = sshll.u32 %s2, 4
  %s20 = int_to_ptr.vmem [resolvable:$true] %s19
  %22 = dma.vmem_to_smem %s20, 16, [#allocation6], [#allocation3]
  %23 = dma.done [#allocation3], 48
  %24 = sfence
  loop: start=0, step=1, limit=20
  $region2: #{_downsample_conv_impl.1} parent=0 // loop_pre_header
    _
  $region3: #{_downsample_conv_impl.1} parent=0 // loop_header
    %s26 = sphi 0, %s30
    %p27 = scmp.ge.s32.totalorder %s26, 20
    %s33 = sphi 0, %s59
    %s34 = sphi 0, %s55
    %s35 = sphi 0, %s51
    %s36 = sphi 0, %s47
    %s37 = sphi 0, %s33
    %s38 = sphi 0, %s34
    %s39 = sphi 0, %s35
    %s40 = sphi 0, %s36
    %s41 = sphi 0, %s37
    %s42 = sphi 0, %s38
    %s43 = sphi 0, %s39
    %s44 = sphi 0, %s40
    %s68 = sphi 0, %s70
    %s71 = sphi 0, %s68
    %s72 = sphi 0, %s71
    %s88 = sphi 0, %s72
    %s94 = sphi 0, %s96
    %s97 = sphi 0, %s94
    %s98 = sphi 0, %s97
    %s114 = sphi 0, %s98
    %s120 = sphi 0, %s122
    %s123 = sphi 0, %s120
    %s124 = sphi 0, %s123
    %s140 = sphi 0, %s124
    %s150 = sphi 0, %s152
    %s153 = sphi 0, %s150
    %s154 = sphi 0, %s153
    %s170 = sphi 0, %s154
  $region4: #{_downsample_conv_impl.1} parent=0 // loop_header_branch
    %29 = sbr.rel (%p27) target = $region8
  $region5: #{_downsample_conv_impl.1} parent=0 // loop_body
    %s31 = ssub.s32 %s26, 1
    %s32 = ssub.s32 %s26, 2
    %s45 = sadd.s32 1, %s36
    %p46 = scmp.ge.s32.totalorder %s45, 9
    %s47 = scalar_select %p46, 0, %s45
    %s48 = sadd.s32 1, %s35
    %s49 = scalar_select %p46, %s48, %s35
    %p50 = scmp.ge.s32.totalorder %s49, 1
    %s51 = scalar_select %p50, 0, %s49
    %s52 = sadd.s32 1, %s34
    %s53 = scalar_select %p50, %s52, %s34
    %p54 = scmp.ge.s32.totalorder %s53, 1
    %s55 = scalar_select %p54, 0, %s53
    %s56 = sadd.s32 1, %s33
    %s57 = scalar_select %p54, %s56, %s33
    %p58 = scmp.ge.s32.totalorder %s57, 2
    %s59 = scalar_select %p58, 0, %s57
    %s60 = sld [smem:[#allocation4 + %s36]]
    %s61 = sld [smem:[#allocation4 + %s47]]
    %s62 = ssub.s32 %s33, %s59
    %s63 = ssub.s32 %s60, %s61
    %s64 = sor.u32 %s62, %s63
    %s65 = ssub.s32 %s35, %s51
    %s66 = sor.u32 %s64, %s65
    %p67 = scmp.eq.s32.totalorder %s66, 0
    %s69 = sadd.s32 %s68, 1
    %s70 = scalar_select %p67, %s68, %s69
    %p73 = pneg %p67
    %p74 = scmp.eq.s32.totalorder %s26, 17
    %p75 = por %p73, %p74
    %p76 = scmp.ne.s32.totalorder %s68, %s71
    %p77 = scmp.eq.s32.totalorder %s26, 0
    %p78 = por %p76, %p77
    %p79 = scmp.ne.s32.totalorder %s68, %s71
    %p80 = scmp.eq.s32.totalorder %s31, 17
    %p81 = por %p79, %p80
    %p82 = scmp.ne.s32.totalorder %s71, %s72
    %p83 = scmp.eq.s32.totalorder %s31, 0
    %p84 = por %p82, %p83
    %p85 = scmp.ne.s32.totalorder %s71, %s72
    %p86 = scmp.eq.s32.totalorder %s32, 17
    %p87 = por %p85, %p86
    %p89 = scmp.ne.s32.totalorder %s72, %s88
    %p90 = scmp.eq.s32.totalorder %s32, 0
    %p91 = por %p89, %p90
    %s92 = ssub.s32 %s34, %s55
    %p93 = scmp.eq.s32.totalorder %s92, 0
    %s95 = sadd.s32 %s94, 1
    %s96 = scalar_select %p93, %s94, %s95
    %p99 = pneg %p93
    %p100 = scmp.eq.s32.totalorder %s26, 17
    %p101 = por %p99, %p100
    %p102 = scmp.ne.s32.totalorder %s94, %s97
    %p103 = scmp.eq.s32.totalorder %s26, 0
    %p104 = por %p102, %p103
    %p105 = scmp.ne.s32.totalorder %s94, %s97
    %p106 = scmp.eq.s32.totalorder %s31, 17
    %p107 = por %p105, %p106
    %p108 = scmp.ne.s32.totalorder %s97, %s98
    %p109 = scmp.eq.s32.totalorder %s31, 0
    %p110 = por %p108, %p109
    %p111 = scmp.ne.s32.totalorder %s97, %s98
    %p112 = scmp.eq.s32.totalorder %s32, 17
    %p113 = por %p111, %p112
    %p115 = scmp.ne.s32.totalorder %s98, %s114
    %p116 = scmp.eq.s32.totalorder %s32, 0
    %p117 = por %p115, %p116
    %s118 = ssub.s32 %s34, %s55
    %p119 = scmp.eq.s32.totalorder %s118, 0
    %s121 = sadd.s32 %s120, 1
    %s122 = scalar_select %p119, %s120, %s121
    %p125 = pneg %p119
    %p126 = scmp.eq.s32.totalorder %s26, 17
    %p127 = por %p125, %p126
    %p128 = scmp.ne.s32.totalorder %s120, %s123
    %p129 = scmp.eq.s32.totalorder %s26, 0
    %p130 = por %p128, %p129
    %p131 = scmp.ne.s32.totalorder %s120, %s123
    %p132 = scmp.eq.s32.totalorder %s31, 17
    %p133 = por %p131, %p132
    %p134 = scmp.ne.s32.totalorder %s123, %s124
    %p135 = scmp.eq.s32.totalorder %s31, 0
    %p136 = por %p134, %p135
    %p137 = scmp.ne.s32.totalorder %s123, %s124
    %p138 = scmp.eq.s32.totalorder %s32, 17
    %p139 = por %p137, %p138
    %p141 = scmp.ne.s32.totalorder %s124, %s140
    %p142 = scmp.eq.s32.totalorder %s32, 0
    %p143 = por %p141, %p142
    %s144 = ssub.s32 %s33, %s59
    %s145 = ssub.s32 %s35, %s51
    %s146 = sor.u32 %s144, %s145
    %s147 = ssub.s32 %s34, %s55
    %s148 = sor.u32 %s146, %s147
    %p149 = scmp.eq.s32.totalorder %s148, 0
    %s151 = sadd.s32 %s150, 1
    %s152 = scalar_select %p149, %s150, %s151
    %p155 = pneg %p149
    %p156 = scmp.eq.s32.totalorder %s26, 17
    %p157 = por %p155, %p156
    %p158 = scmp.ne.s32.totalorder %s150, %s153
    %p159 = scmp.eq.s32.totalorder %s26, 0
    %p160 = por %p158, %p159
    %p161 = scmp.ne.s32.totalorder %s150, %s153
    %p162 = scmp.eq.s32.totalorder %s31, 17
    %p163 = por %p161, %p162
    %p164 = scmp.ne.s32.totalorder %s153, %s154
    %p165 = scmp.eq.s32.totalorder %s31, 0
    %p166 = por %p164, %p165
    %p167 = scmp.ne.s32.totalorder %s153, %s154
    %p168 = scmp.eq.s32.totalorder %s32, 17
    %p169 = por %p167, %p168
    %p171 = scmp.ne.s32.totalorder %s154, %s170
    %p172 = scmp.eq.s32.totalorder %s32, 0
    %p173 = por %p171, %p172
    %p174 = scmp.le.s32.totalorder 1, %s26
    %p175 = scmp.lt.s32.totalorder %s26, 19
    %p176 = pnand %p174, %p175
    %p177 = pneg %p176
    // Predicated region
    $region9: #{_downsample_conv_impl.1} parent=5 // pred_check
      _
    $region10: #{_downsample_conv_impl.1} parent=5 // pred_check_branch
      %179 = sbr.rel (%p176) target = $region12
    $region11: #{_downsample_conv_impl.1} parent=5 // pred_region
      %s180 = ssub.s32 %s26, 1
      // Predicated region
      $region13: #{_downsample_conv_impl.1} parent=11 // pred_check
        %p181 = pneg %p110
      $region14: #{_downsample_conv_impl.1} parent=11 // pred_check_branch
        %183 = sbr.rel (%p181) target = $region16
      $region15: #{_downsample_conv_impl.1} parent=11 // pred_region
        %p184 = scmp.lt.s32.totalorder %s38, 0
        %s185 = scalar_select %p184, %s38, 0
        %s186 = smul.addr %s185, 2
        %s187 = scalar_lea.vmem %s4, %s186
      $region16: #{_downsample_conv_impl.1} parent=11 // pred_fallthru
        _
      // Predicated region
      $region17: #{_downsample_conv_impl.1} parent=11 // pred_check
        %p188 = pneg %p136
      $region18: #{_downsample_conv_impl.1} parent=11 // pred_check_branch
        %190 = sbr.rel (%p188) target = $region20
      $region19: #{_downsample_conv_impl.1} parent=11 // pred_region
        %p191 = scmp.lt.s32.totalorder %s38, 0
        %s192 = scalar_select %p191, %s38, 0
        %s193 = scalar_lea.vmem %s5, %s192
      $region20: #{_downsample_conv_impl.1} parent=11 // pred_fallthru
        _
    $region12: #{_downsample_conv_impl.1} parent=5 // pred_fallthru
      _
    %p194 = scmp.lt.s32.totalorder %s26, 18
    // Predicated region
    $region21: #{_downsample_conv_impl.1} parent=5 // pred_check
      %p195 = pneg %p194
    $region22: #{_downsample_conv_impl.1} parent=5 // pred_check_branch
      %197 = sbr.rel (%p195) target = $region24
    $region23: #{_downsample_conv_impl.1} parent=5 // pred_region
      // Predicated region
      $region25: #{_downsample_conv_impl.1} parent=23 // pred_check
        %p198 = pneg %p78
      $region26: #{_downsample_conv_impl.1} parent=23 // pred_check_branch
        %200 = sbr.rel (%p198) target = $region28
      $region27: #{_downsample_conv_impl.1} parent=23 // pred_region
        %s201 = sld [smem:[#allocation4 + %s36]]
        %p202 = scmp.lt.s32.totalorder %s33, 1
        %s203 = scalar_select %p202, %s33, 1
        %p204 = scmp.lt.s32.totalorder %s201, 3
        %s205 = scalar_select %p204, %s201, 3
        %p206 = scmp.lt.s32.totalorder %s35, 0
        %s207 = scalar_select %p206, %s35, 0
        %s208 = smul.addr %s207, 18
        %s209 = smul.addr %s205, 18
        %s210 = sadd.s32 %s208, %s209
        %s211 = smul.addr %s203, 72
        %s212 = sadd.s32 %s210, %s211
        %s213 = smul.addr %s212, 4
        %s214 = scalar_lea.vmem %s3, %s213
        %s215 = sld [smem:[#allocation4 + %s36]]
      $region28: #{_downsample_conv_impl.1} parent=23 // pred_fallthru
        _
    $region24: #{_downsample_conv_impl.1} parent=5 // pred_fallthru
      _
    %p216 = scmp.le.s32.totalorder 1, %s26
    %p217 = scmp.lt.s32.totalorder %s26, 19
    %p218 = pnand %p216, %p217
    %p219 = pneg %p218
    // Predicated region
    $region29: #{_downsample_conv_impl.1} parent=5 // pred_check
      _
    $region30: #{_downsample_conv_impl.1} parent=5 // pred_check_branch
      %221 = sbr.rel (%p218) target = $region32
    $region31: #{_downsample_conv_impl.1} parent=5 // pred_region
      %s222 = ssub.s32 %s26, 1
      %s223 = sld [smem:[#allocation4 + %s40]]
      %p224 = scmp.lt.s32.totalorder %s37, 1
      %s225 = scalar_select %p224, %s37, 1
      %p226 = scmp.lt.s32.totalorder %s223, 3
      %s227 = scalar_select %p226, %s223, 3
      %p228 = scmp.lt.s32.totalorder %s39, 0
      %s229 = scalar_select %p228, %s39, 0
      %s230 = smul.addr %s229, 18
      %s231 = smul.addr %s227, 18
      %s232 = sadd.s32 %s230, %s231
      %s233 = smul.addr %s225, 72
      %s234 = sadd.s32 %s232, %s233
      %s235 = smul.addr %s234, 4
      %s236 = scalar_lea.vmem %s3, %s235
      %p237 = pneg %p84
      %p238 = pneg %p81
      %p239 = scmp.lt.s32.totalorder %s38, 0
      %s240 = scalar_select %p239, %s38, 0
      %s241 = smul.addr %s240, 2
      %s242 = scalar_lea.vmem %s4, %s241
      %p243 = pneg %p110
      %p244 = pneg %p107
      %p245 = scmp.lt.s32.totalorder %s38, 0
      %s246 = scalar_select %p245, %s38, 0
      %s247 = scalar_lea.vmem %s5, %s246
      %p248 = pneg %p136
      %p249 = pneg %p133
      %p250 = pneg %p166
      %p251 = pneg %p163
      %p252 = scmp.lt.s32.totalorder %s37, 1
      %s253 = scalar_select %p252, %s37, 1
      %p254 = scmp.lt.s32.totalorder %s39, 0
      %s255 = scalar_select %p254, %s39, 0
      %p256 = scmp.lt.s32.totalorder %s38, 0
      %s257 = scalar_select %p256, %s38, 0
      %s258 = smul.addr %s255, 8
      %s259 = sadd.s32 %s257, %s258
      %s260 = smul.addr %s253, 8
      %s261 = sadd.s32 %s259, %s260
      %s262 = smul.addr %s261, 8
      %s263 = scalar_lea.vmem %s6, %s262
      %s264 = sld [smem:[#allocation4 + %s40]]
      %p265 = scmp.lt.s32.totalorder %s37, 1
      %s266 = scalar_select %p265, %s37, 1
      %p267 = scmp.lt.s32.totalorder %s264, 3
      %s268 = scalar_select %p267, %s264, 3
      %p269 = scmp.lt.s32.totalorder %s39, 0
      %s270 = scalar_select %p269, %s39, 0
      %s271 = smul.addr %s270, 18
      %s272 = smul.addr %s268, 18
      %s273 = sadd.s32 %s271, %s272
      %s274 = smul.addr %s266, 72
      %s275 = sadd.s32 %s273, %s274
      %s276 = smul.addr %s275, 4
      %s277 = scalar_lea.vmem %s3, %s276
      %s278 = sld [smem:[#allocation4 + %s40]]
      %p279 = scmp.lt.s32.totalorder %s38, 0
      %s280 = scalar_select %p279, %s38, 0
      %s281 = smul.addr %s280, 2
      %s282 = scalar_lea.vmem %s4, %s281
      %p283 = scmp.lt.s32.totalorder %s38, 0
      %s284 = scalar_select %p283, %s38, 0
      %s285 = scalar_lea.vmem %s5, %s284
      %p286 = scmp.lt.s32.totalorder %s37, 1
      %s287 = scalar_select %p286, %s37, 1
      %p288 = scmp.lt.s32.totalorder %s39, 0
      %s289 = scalar_select %p288, %s39, 0
      %p290 = scmp.lt.s32.totalorder %s38, 0
      %s291 = scalar_select %p290, %s38, 0
      %s292 = smul.addr %s289, 8
      %s293 = sadd.s32 %s291, %s292
      %s294 = smul.addr %s287, 8
      %s295 = sadd.s32 %s293, %s294
      %s296 = smul.addr %s295, 8
      %s297 = scalar_lea.vmem %s6, %s296
      %p299 = scmp.eq.s32.totalorder %s40, 0
      // Predicated region
      $region33: #{_downsample_conv_impl.1} parent=31 // pred_check
        %p300 = pneg %p299
      $region34: #{_downsample_conv_impl.1} parent=31 // pred_check_branch
        %302 = sbr.rel (%p300) target = $region36
      $region35: #{_downsample_conv_impl.1} parent=31 // pred_region
        %303 = vst [vmem:[#allocation2] sm:$0xff] 0.0
        %304 = vst [vmem:[#allocation2 + $0x8] sm:$0xff] 0.0
        %305 = vst [vmem:[#allocation2 + $0x10] sm:$0xff] 0.0
        %306 = vst [vmem:[#allocation2 + $0x18] sm:$0xff] 0.0
        %307 = vst [vmem:[#allocation2 + $0x20] sm:$0xff] 0.0
        %308 = vst [vmem:[#allocation2 + $0x28] sm:$0xff] 0.0
        %309 = vst [vmem:[#allocation2 + $0x30] sm:$0xff] 0.0
        %310 = vst [vmem:[#allocation2 + $0x38] sm:$0xff] 0.0
      $region36: #{_downsample_conv_impl.1} parent=31 // pred_fallthru
        _
      %s311 = sld [smem:[#allocation5 + %s40]]
      %s312 = sld [smem:[#allocation6 + %s40]]
      %s313 = smul.u32 %s311, 2
      %s314 = smul.addr %s313, 4
      %s315 = scalar_lea.vmem %s277, %s314
      %v316 = vld [vmem:[%s315] sm:$0xf]
      %v317 = vld [vmem:[%s315 + $0x4] sm:$0x1]
      %v318 = vld [vmem:[%s315 + $0x8] sm:$0xf]
      %v319 = vld [vmem:[%s315 + $0xc] sm:$0x1]
      %v320 = vld [vmem:[%s315 + $0x10] sm:$0xf]
      %v321 = vld [vmem:[%s315 + $0x14] sm:$0x1]
      %v322 = vld [vmem:[%s315 + $0x18] sm:$0xf]
      %v323 = vld [vmem:[%s315 + $0x1c] sm:$0x1]
      %v324 = vld [vmem:[%s315 + $0x20] sm:$0xf]
      %v325 = vld [vmem:[%s315 + $0x24] sm:$0x1]
      %v326 = vld [vmem:[%s315 + $0x28] sm:$0xf]
      %v327 = vld [vmem:[%s315 + $0x2c] sm:$0x1]
      %v328 = vld [vmem:[%s315 + $0x30] sm:$0xf]
      %v329 = vld [vmem:[%s315 + $0x34] sm:$0x1]
      %v330 = vld [vmem:[%s315 + $0x38] sm:$0xf]
      %v331 = vld [vmem:[%s315 + $0x3c] sm:$0x1]
      %s332 = smul.addr %s40, 2
      %s333 = scalar_lea.vmem %s282, %s332
      %v334 = vld [vmem:[%s333] sm:$0x3]
      %p335 = scmp.eq.s32.totalorder %s312, 0
      // Predicated region
      $region37: #{_downsample_conv_impl.1} parent=31 // pred_check
        %p336 = pneg %p335
      $region38: #{_downsample_conv_impl.1} parent=31 // pred_check_branch
        %338 = sbr.rel (%p336) target = $region40
      $region39: #{_downsample_conv_impl.1} parent=31 // pred_region
        %v339 = vld [vmem:[#allocation2] sm:$0xff]
        %v340 = vld [vmem:[#allocation2 + $0x8] sm:$0xff]
        %v341 = vld [vmem:[#allocation2 + $0x10] sm:$0xff]
        %v342 = vld [vmem:[#allocation2 + $0x18] sm:$0xff]
        %v343 = vld [vmem:[#allocation2 + $0x20] sm:$0xff]
        %v344 = vld [vmem:[#allocation2 + $0x28] sm:$0xff]
        %v345 = vld [vmem:[#allocation2 + $0x30] sm:$0xff]
        %v346 = vld [vmem:[#allocation2 + $0x38] sm:$0xff]
        %v355 = vunpack.c.l.b16 %v316
        %v356 = vunpack.c.l.b16 %v318
        %v357 = vunpack.c.l.b16 %v320
        %v358 = vunpack.c.l.b16 %v322
        %v359 = vunpack.c.l.b16 %v324
        %v360 = vunpack.c.l.b16 %v326
        %v361 = vunpack.c.l.b16 %v328
        %v362 = vunpack.c.l.b16 %v330
        %v363 = vpack.c.b16 %v356, %v355
        %v364 = vpack.c.b16 %v358, %v357
        %v365 = vpack.c.b16 %v360, %v359
        %v366 = vpack.c.b16 %v362, %v361
        %vm367 = vcmask 31744
        %v369 = vsel %vm367, %v363, 0
        %v372 = vsel %vm367, %v364, 0
        %v375 = vsel %vm367, %v365, 0
        %v378 = vsel %vm367, %v366, 0
        %vm380 = vcmask 1041408
        %v382 = vsel %vm380, %v334, 0
        %384 = vmatprep.subr.bf16.mxu0 0
        %385 = vmatpush1.bf16.msra.mxu0 0
        %386 = vmatprep.subr.bf16.mxu0 0
        %387 = vmatpush1.bf16.msra.mxu0 0
        %388 = vmatprep.subr.bf16.mxu0 0
        %389 = vmatpush1.bf16.msra.mxu0 0
        %390 = vmatprep.subr.bf16.mxu0 0
        %391 = vmatpush1.bf16.msra.mxu0 0
        %392 = vmatprep.subr.bf16.mxu0 0
        %393 = vmatpush1.bf16.msra.mxu0 0
        %394 = vmatprep.subr.bf16.mxu0 0
        %395 = vmatpush1.bf16.msra.mxu0 0
        %396 = vmatprep.subr.bf16.mxu0 0
        %397 = vmatpush1.bf16.msra.mxu0 0
        %398 = vmatprep.subr.bf16.mxu0 0
        %399 = vmatpush1.bf16.msra.mxu0 %v382
        %400 = vmatprep.subr.bf16.mxu0 0
        %401 = vmatpush2.bf16.msra.mxu0 0
        %402 = vmatprep.subr.bf16.mxu0 0
        %403 = vmatpush2.bf16.msra.mxu0 0
        %404 = vmatprep.subr.bf16.mxu0 0
        %405 = vmatpush2.bf16.msra.mxu0 0
        %406 = vmatprep.subr.bf16.mxu0 0
        %407 = vmatpush2.bf16.msra.mxu0 0
        %408 = vmatprep.subr.bf16.mxu0 0
        %409 = vmatpush2.bf16.msra.mxu0 0
        %410 = vmatprep.subr.bf16.mxu0 0
        %411 = vmatpush2.bf16.msra.mxu0 0
        %412 = vmatprep.subr.bf16.mxu0 0
        %413 = vmatpush2.bf16.msra.mxu0 0
        %414 = vmatprep.subr.bf16.mxu0 0
        %415 = vmatpush2.bf16.msra.mxu0 0
        %416 = vmatprep.mubr.bf16.mxu0 0
        %417 = vmatmul.mubr.bf16.gmra.mxu0 %v369
        %v418 = vpop.f32.mrf.mxu0
        %v419 = vadd.f32 0.0, %v418
        %v420 = vpop.f32.mrf.mxu0
        %v421 = vpop.f32.mrf.mxu0
        %v422 = vadd.f32 0.0, %v421
        %v423 = vpop.f32.mrf.mxu0
        %424 = vmatprep.mubr.bf16.mxu0 0
        %425 = vmatmul.mubr.bf16.gmra.mxu0 %v372
        %v426 = vpop.f32.mrf.mxu0
        %v427 = vadd.f32 0.0, %v426
        %v428 = vpop.f32.mrf.mxu0
        %v429 = vpop.f32.mrf.mxu0
        %v430 = vadd.f32 0.0, %v429
        %v431 = vpop.f32.mrf.mxu0
        %432 = vmatprep.mubr.bf16.mxu0 0
        %433 = vmatmul.mubr.bf16.gmra.mxu0 %v375
        %v434 = vpop.f32.mrf.mxu0
        %v435 = vadd.f32 0.0, %v434
        %v436 = vpop.f32.mrf.mxu0
        %v437 = vpop.f32.mrf.mxu0
        %v438 = vadd.f32 0.0, %v437
        %v439 = vpop.f32.mrf.mxu0
        %440 = vmatprep.mubr.bf16.mxu0 0
        %441 = vmatmul.mubr.bf16.gmra.mxu0 %v378
        %v442 = vpop.f32.mrf.mxu0
        %v443 = vadd.f32 0.0, %v442
        %v444 = vpop.f32.mrf.mxu0
        %v445 = vpop.f32.mrf.mxu0
        %v446 = vadd.f32 0.0, %v445
        %v447 = vpop.f32.mrf.mxu0
        %448 = vdwg.mxu0
        %v449 = vadd.f32 %v339, %v419
        %v450 = vadd.f32 %v340, %v422
        %v451 = vadd.f32 %v341, %v427
        %v452 = vadd.f32 %v342, %v430
        %v453 = vadd.f32 %v343, %v435
        %v454 = vadd.f32 %v344, %v438
        %v455 = vadd.f32 %v345, %v443
        %v456 = vadd.f32 %v346, %v446
        %457 = vst [vmem:[#allocation2] sm:$0xff] %v449
        %458 = vst [vmem:[#allocation2 + $0x8] sm:$0xff] %v450
        %459 = vst [vmem:[#allocation2 + $0x10] sm:$0xff] %v451
        %460 = vst [vmem:[#allocation2 + $0x18] sm:$0xff] %v452
        %461 = vst [vmem:[#allocation2 + $0x20] sm:$0xff] %v453
        %462 = vst [vmem:[#allocation2 + $0x28] sm:$0xff] %v454
        %463 = vst [vmem:[#allocation2 + $0x30] sm:$0xff] %v455
        %464 = vst [vmem:[#allocation2 + $0x38] sm:$0xff] %v456
      $region40: #{_downsample_conv_impl.1} parent=31 // pred_fallthru
        _
      %p465 = scmp.eq.s32.totalorder %s312, 1
      // Predicated region
      $region41: #{_downsample_conv_impl.1} parent=31 // pred_check
        %p466 = pneg %p465
      $region42: #{_downsample_conv_impl.1} parent=31 // pred_check_branch
        %468 = sbr.rel (%p466) target = $region44
      $region43: #{_downsample_conv_impl.1} parent=31 // pred_region
        %vm469 = vsmask.f32 3328
        %vm470 = vsmask.f32 7440
        %vm471 = vmor %vm469, %vm470
        %v473 = vshrl.u32 %v316, 16
        %v475 = vrot.slane %v473, 4
        %v476 = vshll.u32 %v316, 16
        %v478 = vrot.slane %v476, 5
        %v479 = vor.u32 %v475, %v478
        %v480 = vrot.slane %v479, 4
        %v482 = vshll.u32 %v317, 16
        %v484 = vrot.slane %v482, 5
        %v485 = vsel %vm471, %v480, %v484
        %v487 = vshrl.u32 %v318, 16
        %v489 = vrot.slane %v487, 4
        %v490 = vshll.u32 %v318, 16
        %v492 = vrot.slane %v490, 5
        %v493 = vor.u32 %v489, %v492
        %v494 = vrot.slane %v493, 4
        %v496 = vshll.u32 %v319, 16
        %v498 = vrot.slane %v496, 5
        %v499 = vsel %vm471, %v494, %v498
        %v501 = vshrl.u32 %v320, 16
        %v503 = vrot.slane %v501, 4
        %v504 = vshll.u32 %v320, 16
        %v506 = vrot.slane %v504, 5
        %v507 = vor.u32 %v503, %v506
        %v508 = vrot.slane %v507, 4
        %v510 = vshll.u32 %v321, 16
        %v512 = vrot.slane %v510, 5
        %v513 = vsel %vm471, %v508, %v512
        %v515 = vshrl.u32 %v322, 16
        %v517 = vrot.slane %v515, 4
        %v518 = vshll.u32 %v322, 16
        %v520 = vrot.slane %v518, 5
        %v521 = vor.u32 %v517, %v520
        %v522 = vrot.slane %v521, 4
        %v524 = vshll.u32 %v323, 16
        %v526 = vrot.slane %v524, 5
        %v527 = vsel %vm471, %v522, %v526
        %v529 = vshrl.u32 %v324, 16
        %v531 = vrot.slane %v529, 4
        %v532 = vshll.u32 %v324, 16
        %v534 = vrot.slane %v532, 5
        %v535 = vor.u32 %v531, %v534
        %v536 = vrot.slane %v535, 4
        %v538 = vshll.u32 %v325, 16
        %v540 = vrot.slane %v538, 5
        %v541 = vsel %vm471, %v536, %v540
        %v543 = vshrl.u32 %v326, 16
        %v545 = vrot.slane %v543, 4
        %v546 = vshll.u32 %v326, 16
        %v548 = vrot.slane %v546, 5
        %v549 = vor.u32 %v545, %v548
        %v550 = vrot.slane %v549, 4
        %v552 = vshll.u32 %v327, 16
        %v554 = vrot.slane %v552, 5
        %v555 = vsel %vm471, %v550, %v554
        %v557 = vshrl.u32 %v328, 16
        %v559 = vrot.slane %v557, 4
        %v560 = vshll.u32 %v328, 16
        %v562 = vrot.slane %v560, 5
        %v563 = vor.u32 %v559, %v562
        %v564 = vrot.slane %v563, 4
        %v566 = vshll.u32 %v329, 16
        %v568 = vrot.slane %v566, 5
        %v569 = vsel %vm471, %v564, %v568
        %v571 = vshrl.u32 %v330, 16
        %v573 = vrot.slane %v571, 4
        %v574 = vshll.u32 %v330, 16
        %v576 = vrot.slane %v574, 5
        %v577 = vor.u32 %v573, %v576
        %v578 = vrot.slane %v577, 4
        %v580 = vshll.u32 %v331, 16
        %v582 = vrot.slane %v580, 5
        %v583 = vsel %vm471, %v578, %v582
        %v584 = vld [vmem:[#allocation2] sm:$0xff]
        %v585 = vld [vmem:[#allocation2 + $0x8] sm:$0xff]
        %v586 = vld [vmem:[#allocation2 + $0x10] sm:$0xff]
        %v587 = vld [vmem:[#allocation2 + $0x18] sm:$0xff]
        %v588 = vld [vmem:[#allocation2 + $0x20] sm:$0xff]
        %v589 = vld [vmem:[#allocation2 + $0x28] sm:$0xff]
        %v590 = vld [vmem:[#allocation2 + $0x30] sm:$0xff]
        %v591 = vld [vmem:[#allocation2 + $0x38] sm:$0xff]
        %v592 = vunpack.c.l.b16 %v485
        %v593 = vunpack.c.l.b16 %v499
        %v594 = vunpack.c.l.b16 %v513
        %v595 = vunpack.c.l.b16 %v527
        %v596 = vunpack.c.l.b16 %v541
        %v597 = vunpack.c.l.b16 %v555
        %v598 = vunpack.c.l.b16 %v569
        %v599 = vunpack.c.l.b16 %v583
        %v600 = vpack.c.b16 %v593, %v592
        %v601 = vpack.c.b16 %v595, %v594
        %v602 = vpack.c.b16 %v597, %v596
        %v603 = vpack.c.b16 %v599, %v598
        %vm604 = vcmask 31744
        %v606 = vsel %vm604, %v600, 0
        %v609 = vsel %vm604, %v601, 0
        %v612 = vsel %vm604, %v602, 0
        %v615 = vsel %vm604, %v603, 0
        %vm617 = vcmask 1041408
        %v619 = vsel %vm617, %v334, 0
        %621 = vmatprep.subr.bf16.mxu0 0
        %622 = vmatpush1.bf16.msra.mxu0 0
        %623 = vmatprep.subr.bf16.mxu0 0
        %624 = vmatpush1.bf16.msra.mxu0 0
        %625 = vmatprep.subr.bf16.mxu0 0
        %626 = vmatpush1.bf16.msra.mxu0 0
        %627 = vmatprep.subr.bf16.mxu0 0
        %628 = vmatpush1.bf16.msra.mxu0 0
        %629 = vmatprep.subr.bf16.mxu0 0
        %630 = vmatpush1.bf16.msra.mxu0 0
        %631 = vmatprep.subr.bf16.mxu0 0
        %632 = vmatpush1.bf16.msra.mxu0 0
        %633 = vmatprep.subr.bf16.mxu0 0
        %634 = vmatpush1.bf16.msra.mxu0 0
        %635 = vmatprep.subr.bf16.mxu0 0
        %636 = vmatpush1.bf16.msra.mxu0 %v619
        %637 = vmatprep.subr.bf16.mxu0 0
        %638 = vmatpush2.bf16.msra.mxu0 0
        %639 = vmatprep.subr.bf16.mxu0 0
        %640 = vmatpush2.bf16.msra.mxu0 0
        %641 = vmatprep.subr.bf16.mxu0 0
        %642 = vmatpush2.bf16.msra.mxu0 0
        %643 = vmatprep.subr.bf16.mxu0 0
        %644 = vmatpush2.bf16.msra.mxu0 0
        %645 = vmatprep.subr.bf16.mxu0 0
        %646 = vmatpush2.bf16.msra.mxu0 0
        %647 = vmatprep.subr.bf16.mxu0 0
        %648 = vmatpush2.bf16.msra.mxu0 0
        %649 = vmatprep.subr.bf16.mxu0 0
        %650 = vmatpush2.bf16.msra.mxu0 0
        %651 = vmatprep.subr.bf16.mxu0 0
        %652 = vmatpush2.bf16.msra.mxu0 0
        %653 = vmatprep.mubr.bf16.mxu0 0
        %654 = vmatmul.mubr.bf16.gmra.mxu0 %v606
        %v655 = vpop.f32.mrf.mxu0
        %v656 = vadd.f32 0.0, %v655
        %v657 = vpop.f32.mrf.mxu0
        %v658 = vpop.f32.mrf.mxu0
        %v659 = vadd.f32 0.0, %v658
        %v660 = vpop.f32.mrf.mxu0
        %661 = vmatprep.mubr.bf16.mxu0 0
        %662 = vmatmul.mubr.bf16.gmra.mxu0 %v609
        %v663 = vpop.f32.mrf.mxu0
        %v664 = vadd.f32 0.0, %v663
        %v665 = vpop.f32.mrf.mxu0
        %v666 = vpop.f32.mrf.mxu0
        %v667 = vadd.f32 0.0, %v666
        %v668 = vpop.f32.mrf.mxu0
        %669 = vmatprep.mubr.bf16.mxu0 0
        %670 = vmatmul.mubr.bf16.gmra.mxu0 %v612
        %v671 = vpop.f32.mrf.mxu0
        %v672 = vadd.f32 0.0, %v671
        %v673 = vpop.f32.mrf.mxu0
        %v674 = vpop.f32.mrf.mxu0
        %v675 = vadd.f32 0.0, %v674
        %v676 = vpop.f32.mrf.mxu0
        %677 = vmatprep.mubr.bf16.mxu0 0
        %678 = vmatmul.mubr.bf16.gmra.mxu0 %v615
        %v679 = vpop.f32.mrf.mxu0
        %v680 = vadd.f32 0.0, %v679
        %v681 = vpop.f32.mrf.mxu0
        %v682 = vpop.f32.mrf.mxu0
        %v683 = vadd.f32 0.0, %v682
        %v684 = vpop.f32.mrf.mxu0
        %685 = vdwg.mxu0
        %v686 = vadd.f32 %v584, %v656
        %v687 = vadd.f32 %v585, %v659
        %v688 = vadd.f32 %v586, %v664
        %v689 = vadd.f32 %v587, %v667
        %v690 = vadd.f32 %v588, %v672
        %v691 = vadd.f32 %v589, %v675
        %v692 = vadd.f32 %v590, %v680
        %v693 = vadd.f32 %v591, %v683
        %694 = vst [vmem:[#allocation2] sm:$0xff] %v686
        %695 = vst [vmem:[#allocation2 + $0x8] sm:$0xff] %v687
        %696 = vst [vmem:[#allocation2 + $0x10] sm:$0xff] %v688
        %697 = vst [vmem:[#allocation2 + $0x18] sm:$0xff] %v689
        %698 = vst [vmem:[#allocation2 + $0x20] sm:$0xff] %v690
        %699 = vst [vmem:[#allocation2 + $0x28] sm:$0xff] %v691
        %700 = vst [vmem:[#allocation2 + $0x30] sm:$0xff] %v692
        %701 = vst [vmem:[#allocation2 + $0x38] sm:$0xff] %v693
      $region44: #{_downsample_conv_impl.1} parent=31 // pred_fallthru
        _
      %p702 = scmp.eq.s32.totalorder %s40, 8
      // Predicated region
      $region45: #{_downsample_conv_impl.1} parent=31 // pred_check
        %p703 = pneg %p702
      $region46: #{_downsample_conv_impl.1} parent=31 // pred_check_branch
        %705 = sbr.rel (%p703) target = $region48
      $region47: #{_downsample_conv_impl.1} parent=31 // pred_region
        %v706 = vld [vmem:[#allocation2] sm:$0xff]
        %v707 = vld [vmem:[#allocation2 + $0x8] sm:$0xff]
        %v708 = vld [vmem:[#allocation2 + $0x10] sm:$0xff]
        %v709 = vld [vmem:[#allocation2 + $0x18] sm:$0xff]
        %v710 = vld [vmem:[#allocation2 + $0x20] sm:$0xff]
        %v711 = vld [vmem:[#allocation2 + $0x28] sm:$0xff]
        %v712 = vld [vmem:[#allocation2 + $0x30] sm:$0xff]
        %v713 = vld [vmem:[#allocation2 + $0x38] sm:$0xff]
        %v714 = vld [vmem:[%s285] sm:$0x1]
        %v716 = vlaneseq
        %v717 = vshrl.u32 %v716, 7
        %v718 = vsub.s32 0, %v717
        %v719 = vrot.slane %v714, %v718
        %v721 = vadd.f32 %v706, %v719
        %v722 = vadd.f32 %v707, %v719
        %v723 = vadd.f32 %v708, %v719
        %v724 = vadd.f32 %v709, %v719
        %v725 = vadd.f32 %v710, %v719
        %v726 = vadd.f32 %v711, %v719
        %v727 = vadd.f32 %v712, %v719
        %v728 = vadd.f32 %v713, %v719
        %729 = vst [vmem:[%s297] sm:$0xff] %v721
        %730 = vst [vmem:[%s297 + $0x8] sm:$0xff] %v722
        %731 = vst [vmem:[%s297 + $0x10] sm:$0xff] %v723
        %732 = vst [vmem:[%s297 + $0x18] sm:$0xff] %v724
        %733 = vst [vmem:[%s297 + $0x20] sm:$0xff] %v725
        %734 = vst [vmem:[%s297 + $0x28] sm:$0xff] %v726
        %735 = vst [vmem:[%s297 + $0x30] sm:$0xff] %v727
        %736 = vst [vmem:[%s297 + $0x38] sm:$0xff] %v728
      $region48: #{_downsample_conv_impl.1} parent=31 // pred_fallthru
        _
      %p737 = scmp.lt.s32.totalorder %s37, 1
      %s738 = scalar_select %p737, %s37, 1
      %p739 = scmp.lt.s32.totalorder %s39, 0
      %s740 = scalar_select %p739, %s39, 0
      %p741 = scmp.lt.s32.totalorder %s38, 0
      %s742 = scalar_select %p741, %s38, 0
      %s743 = smul.addr %s740, 8
      %s744 = sadd.s32 %s742, %s743
      %s745 = smul.addr %s738, 8
      %s746 = sadd.s32 %s744, %s745
      %s747 = smul.addr %s746, 8
      %s748 = scalar_lea.vmem %s6, %s747
      // Predicated region
      $region49: #{_downsample_conv_impl.1} parent=31 // pred_check
        %p749 = pneg %p163
      $region50: #{_downsample_conv_impl.1} parent=31 // pred_check_branch
        %751 = sbr.rel (%p749) target = $region52
      $region51: #{_downsample_conv_impl.1} parent=31 // pred_region
        _
      $region52: #{_downsample_conv_impl.1} parent=31 // pred_fallthru
        _
    $region32: #{_downsample_conv_impl.1} parent=5 // pred_fallthru
      _
    %p752 = scmp.le.s32.totalorder 2, %s26
    // Predicated region
    $region53: #{_downsample_conv_impl.1} parent=5 // pred_check
      %p753 = pneg %p752
    $region54: #{_downsample_conv_impl.1} parent=5 // pred_check_branch
      %755 = sbr.rel (%p753) target = $region56
    $region55: #{_downsample_conv_impl.1} parent=5 // pred_region
      %s756 = ssub.s32 %s26, 2
      // Predicated region
      $region57: #{_downsample_conv_impl.1} parent=55 // pred_check
        %p757 = pneg %p169
      $region58: #{_downsample_conv_impl.1} parent=55 // pred_check_branch
        %759 = sbr.rel (%p757) target = $region60
      $region59: #{_downsample_conv_impl.1} parent=55 // pred_region
        %p760 = scmp.lt.s32.totalorder %s41, 1
        %s761 = scalar_select %p760, %s41, 1
        %p762 = scmp.lt.s32.totalorder %s43, 0
        %s763 = scalar_select %p762, %s43, 0
        %p764 = scmp.lt.s32.totalorder %s42, 0
        %s765 = scalar_select %p764, %s42, 0
        %s766 = smul.addr %s763, 8
        %s767 = sadd.s32 %s765, %s766
        %s768 = smul.addr %s761, 8
        %s769 = sadd.s32 %s767, %s768
        %s770 = smul.addr %s769, 8
        %s771 = scalar_lea.vmem %s6, %s770
      $region60: #{_downsample_conv_impl.1} parent=55 // pred_fallthru
        _
    $region56: #{_downsample_conv_impl.1} parent=5 // pred_fallthru
      _
  $region6: #{_downsample_conv_impl.1} parent=0 // loop_footer
    %s30 = sadd.s32 1, %s26
  $region7: #{_downsample_conv_impl.1} parent=0 // loop_footer_branch
    %25 = sbr.rel target = $region3
  $region8: #{_downsample_conv_impl.1} parent=0 // loop_exit
    _

</llo_original>
